<compile_context>
chip_gen: v6e
topology: v6e:2x2x1
jax: 0.10.0
libtpu: 0.0.40
codegen_flags: <defaults>
</compile_context>

<pallas_src>
import numpy as np
import jax
import jax.numpy as jnp
from jax.experimental import pallas as pl
from jax.experimental.pallas import tpu as pltpu


_UNROLL = 4  # moderate unroll of the serial time loop (full unroll spills vregs)


# ------------------------------ VMEM budgeting --------------------------------

def _vmem_limit_bytes():
    """Conservative per-kernel VMEM budget derived from the chip, with headroom
    for compiler-internal scratch (v5e/v6e: 128 MiB physical, v7x: 64 MiB)."""
    cap = 64 << 20
    try:
        cap = int(getattr(pltpu.get_tpu_info(), "vmem_capacity_bytes", cap))
    except Exception:
        pass
    return max(32 << 20, min(cap * 3 // 4, 96 << 20))


_VMEM_LIMIT = _vmem_limit_bytes()


def _pick_chunk(n, bytes_per_unit, fixed_bytes, budget, align=1):
    """Largest multiple-of-`align` divisor of n such that the double-buffered
    streamed blocks plus resident (weight/scratch) blocks fit in `budget`."""
    avail = max(budget - fixed_bytes, 2 * align * bytes_per_unit)
    target = max(align, avail // (2 * max(bytes_per_unit, 1)))
    if n <= target:
        return n
    c = (min(n, target) // align) * align
    while c >= align:
        if n % c == 0:
            return c
        c -= align
    # TODO(synk): masked-tail handling for awkward N/T instead of one full block.
    return n


# ----------------------------- Pallas kernels ---------------------------------

def _sigmoid_via_tanh(x):
    # sigmoid(x) == 0.5 * (tanh(x/2) + 1): one EUP transcendental instead of exp+recip.
    return 0.5 * jnp.tanh(0.5 * x) + 0.5


def _ln_proj_kernel(x_ref, g_ref, b_ref, wf_ref, wr_ref, bf_ref, br_ref,
                    normed_ref, gif_ref, gir_ref):
    """Fused LayerNorm + layer-0 input projection for both directions.
    Weights are bf16, accumulation f32, gi stored bf16."""
    x = x_ref[...]                                            # (rows, D) f32
    mean = jnp.mean(x, axis=-1, keepdims=True)
    var = jnp.mean(jnp.square(x - mean), axis=-1, keepdims=True)
    normed = (x - mean) * jax.lax.rsqrt(var + 1e-5) * g_ref[...] + b_ref[...]
    normed_ref[...] = normed
    nb = normed.astype(jnp.bfloat16)
    gif_ref[...] = (jnp.dot(nb, wf_ref[...], preferred_element_type=jnp.float32)
                    + bf_ref[...]).astype(gif_ref.dtype)
    gir_ref[...] = (jnp.dot(nb, wr_ref[...], preferred_element_type=jnp.float32)
                    + br_ref[...]).astype(gir_ref.dtype)


def _gru_chunk_recurrence(tc, h_dim, read_gif, read_gir, whf, whr, bnf, bnr,
                          outf_ref, outr_ref, hf_ref, hr_ref):
    """Both GRU directions over one time chunk.  Hidden states are carried as
    loop-carry values; the VMEM h scratches are touched once per chunk."""

    def cell(gi, h, whh, bn):
        gh = jnp.dot(h.astype(jnp.bfloat16), whh,
                     preferred_element_type=jnp.float32)
        r = _sigmoid_via_tanh(gi[:, 0:h_dim] + gh[:, 0:h_dim])
        z = _sigmoid_via_tanh(gi[:, h_dim:2 * h_dim] + gh[:, h_dim:2 * h_dim])
        n = jnp.tanh(gi[:, 2 * h_dim:] + r * (gh[:, 2 * h_dim:] + bn))
        return (1.0 - z) * n + z * h

    def step(i, carry):
        hf, hr = carry
        # forward direction walks the chunk front-to-back
        hf_new = cell(read_gif(i), hf, whf, bnf)
        outf_ref[i] = hf_new.astype(outf_ref.dtype)
        # reverse direction walks the (reverse-indexed) chunk back-to-front
        j = tc - 1 - i
        hr_new = cell(read_gir(j), hr, whr, bnr)
        outr_ref[j] = hr_new.astype(outr_ref.dtype)
        return (hf_new, hr_new)

    hf_fin, hr_fin = jax.lax.fori_loop(
        0, tc, step, (hf_ref[...], hr_ref[...]), unroll=min(_UNROLL, tc))
    hf_ref[...] = hf_fin
    hr_ref[...] = hr_fin


def _birnn_kernel(gif_ref, gir_ref, whhf_ref, whhr_ref, bnf_ref, bnr_ref,
                  outf_ref, outr_ref, hf_ref, hr_ref):
    """Layer-0: both GRU directions, one time-chunk per grid step, consuming the
    precomputed (bf16) input projection."""
    @pl.when(pl.program_id(0) == 0)
    def _():
        hf_ref[...] = jnp.zeros_like(hf_ref)
        hr_ref[...] = jnp.zeros_like(hr_ref)

    tc = gif_ref.shape[0]
    h_dim = hf_ref.shape[-1]
    _gru_chunk_recurrence(
        tc, h_dim,
        lambda i: gif_ref[i].astype(jnp.float32),
        lambda j: gir_ref[j].astype(jnp.float32),
        whhf_ref[...], whhr_ref[...], bnf_ref[...], bnr_ref[...],
        outf_ref, outr_ref, hf_ref, hr_ref)


def _birnn_proj_kernel(f0f_ref, r0f_ref, f0r_ref, r0r_ref,
                       wft_ref, wfb_ref, wrt_ref, wrb_ref, bf_ref, br_ref,
                       whhf_ref, whhr_ref, bnf_ref, bnr_ref,
                       outf_ref, outr_ref, hf_ref, hr_ref):
    """Layer-1: recurrence with the input projection fused in.  Concat-free:
        concat(f0, r0) @ W_ih == f0 @ W_ih[:H] + r0 @ W_ih[H:]
    The projection matmuls depend only on the prefetched layer-0 outputs (not
    on the carried hidden state), so they hide under the serial chain and gi1
    never touches HBM."""
    @pl.when(pl.program_id(0) == 0)
    def _():
        hf_ref[...] = jnp.zeros_like(hf_ref)
        hr_ref[...] = jnp.zeros_like(hr_ref)

    tc = f0f_ref.shape[0]
    h_dim = hf_ref.shape[-1]
    wft = wft_ref[...]
    wfb = wfb_ref[...]
    wrt = wrt_ref[...]
    wrb = wrb_ref[...]
    bf = bf_ref[...]
    br = br_ref[...]

    def read_gif(i):
        return (jnp.dot(f0f_ref[i], wft, preferred_element_type=jnp.float32)
                + jnp.dot(r0f_ref[i], wfb, preferred_element_type=jnp.float32)
                + bf)

    def read_gir(j):
        return (jnp.dot(f0r_ref[j], wrt, preferred_element_type=jnp.float32)
                + jnp.dot(r0r_ref[j], wrb, preferred_element_type=jnp.float32)
                + br)

    _gru_chunk_recurrence(tc, h_dim, read_gif, read_gir,
                          whhf_ref[...], whhr_ref[...], bnf_ref[...], bnr_ref[...],
                          outf_ref, outr_ref, hf_ref, hr_ref)


def _epilogue_kernel(ids_ref, normed_ref, f_ref, r_ref, out_ref,
                     acc_lo, acc_hi, cnt):
    """Fused residual-add + scatter_mean over row chunks.  The one-hot scatter
    matrix is built on the fly from the int32 group-id row (groups on sublanes,
    packed rows on lanes) so the contraction is a natural (G,rows)x(rows,H)
    matmul; group counts accumulate in-kernel."""
    i = pl.program_id(0)
    num_groups = out_ref.shape[0]
    h_dim = f_ref.shape[-1]

    @pl.when(i == 0)
    def _():
        acc_lo[...] = jnp.zeros_like(acc_lo)
        acc_hi[...] = jnp.zeros_like(acc_hi)
        cnt[...] = jnp.zeros_like(cnt)

    ids = ids_ref[...]                                        # (1, rows) int32
    group_iota = jax.lax.broadcasted_iota(jnp.int32, (num_groups, ids.shape[1]), 0)
    onehot = (ids == group_iota).astype(jnp.float32)          # (G, rows)

    res_lo = normed_ref[:, 0:h_dim] + f_ref[...]              # (rows, H)
    res_hi = normed_ref[:, h_dim:2 * h_dim] + r_ref[...]      # (rows, H)
    acc_lo[...] += jnp.dot(onehot, res_lo, preferred_element_type=jnp.float32)
    acc_hi[...] += jnp.dot(onehot, res_hi, preferred_element_type=jnp.float32)
    cnt[...] += jnp.sum(onehot, axis=1, keepdims=True)

    @pl.when(i == pl.num_programs(0) - 1)
    def _():
        denom = jnp.maximum(cnt[...], 1.0)                    # (G, 1)
        out_ref[:, 0:h_dim] = acc_lo[...] / denom
        out_ref[:, h_dim:2 * h_dim] = acc_hi[...] / denom


# ------------------------------ kernel wrappers --------------------------------

def ln_project(x, gamma, beta, wf, wr, bf, br, rows):
    n, d = x.shape
    h3 = wf.shape[1]
    grid = (n // rows,)
    row_d = pl.BlockSpec((rows, d), lambda i: (i, 0))
    row_h3 = pl.BlockSpec((rows, h3), lambda i: (i, 0))

    def const(shape):
        return pl.BlockSpec(shape, lambda i: (0, 0))

    return pl.pallas_call(
        _ln_proj_kernel,
        out_shape=(jax.ShapeDtypeStruct((n, d), jnp.float32),
                   jax.ShapeDtypeStruct((n, h3), jnp.bfloat16),
                   jax.ShapeDtypeStruct((n, h3), jnp.bfloat16)),
        grid=grid,
        in_specs=[row_d, const((1, d)), const((1, d)),
                  const((d, h3)), const((d, h3)),
                  const((1, h3)), const((1, h3))],
        out_specs=(row_d, row_h3, row_h3),
        compiler_params=pltpu.CompilerParams(
            dimension_semantics=("parallel",), vmem_limit_bytes=_VMEM_LIMIT),
    )(x, gamma, beta, wf, wr, bf, br)


def bigru_layer0(gi_f, gi_r, whh_f, whh_r, bn_f, bn_r, tc):
    t, b, h3 = gi_f.shape
    h = h3 // 3
    nchunks = t // tc
    gi_f_spec = pl.BlockSpec((tc, b, h3), lambda i: (i, 0, 0))
    gi_r_spec = pl.BlockSpec((tc, b, h3), lambda i: (nchunks - 1 - i, 0, 0))
    out_f_spec = pl.BlockSpec((tc, b, h), lambda i: (i, 0, 0))
    out_r_spec = pl.BlockSpec((tc, b, h), lambda i: (nchunks - 1 - i, 0, 0))
    w_spec = pl.BlockSpec((h, h3), lambda i: (0, 0))
    b_spec = pl.BlockSpec((1, h), lambda i: (0, 0))
    return pl.pallas_call(
        _birnn_kernel,
        out_shape=(jax.ShapeDtypeStruct((t, b, h), jnp.bfloat16),
                   jax.ShapeDtypeStruct((t, b, h), jnp.bfloat16)),
        grid=(nchunks,),
        in_specs=[gi_f_spec, gi_r_spec, w_spec, w_spec, b_spec, b_spec],
        out_specs=(out_f_spec, out_r_spec),
        scratch_shapes=[pltpu.VMEM((b, h), jnp.float32),
                        pltpu.VMEM((b, h), jnp.float32)],
        compiler_params=pltpu.CompilerParams(
            dimension_semantics=("arbitrary",), vmem_limit_bytes=_VMEM_LIMIT),
    )(gi_f, gi_r, whh_f, whh_r, bn_f, bn_r)


def bigru_layer1_fused(f0, r0, wft, wfb, wrt, wrb, bf, br,
                       whh_f, whh_r, bn_f, bn_r, tc):
    t, b, h = f0.shape
    h3 = 3 * h
    nchunks = t // tc
    fwd_spec = pl.BlockSpec((tc, b, h), lambda i: (i, 0, 0))
    rev_spec = pl.BlockSpec((tc, b, h), lambda i: (nchunks - 1 - i, 0, 0))
    out_f_spec = pl.BlockSpec((tc, b, h), lambda i: (i, 0, 0))
    out_r_spec = pl.BlockSpec((tc, b, h), lambda i: (nchunks - 1 - i, 0, 0))
    w_ih_spec = pl.BlockSpec((h, h3), lambda i: (0, 0))
    b_ih_spec = pl.BlockSpec((1, h3), lambda i: (0, 0))
    whh_spec = pl.BlockSpec((h, h3), lambda i: (0, 0))
    bn_spec = pl.BlockSpec((1, h), lambda i: (0, 0))
    return pl.pallas_call(
        _birnn_proj_kernel,
        out_shape=(jax.ShapeDtypeStruct((t, b, h), jnp.float32),
                   jax.ShapeDtypeStruct((t, b, h), jnp.float32)),
        grid=(nchunks,),
        in_specs=[fwd_spec, fwd_spec, rev_spec, rev_spec,
                  w_ih_spec, w_ih_spec, w_ih_spec, w_ih_spec,
                  b_ih_spec, b_ih_spec,
                  whh_spec, whh_spec, bn_spec, bn_spec],
        out_specs=(out_f_spec, out_r_spec),
        scratch_shapes=[pltpu.VMEM((b, h), jnp.float32),
                        pltpu.VMEM((b, h), jnp.float32)],
        compiler_params=pltpu.CompilerParams(
            dimension_semantics=("arbitrary",), vmem_limit_bytes=_VMEM_LIMIT),
    )(f0, r0, f0, r0, wft, wfb, wrt, wrb, bf, br, whh_f, whh_r, bn_f, bn_r)


def epilogue_scatter_mean(ids_row, normed, f, r, num_groups, rows):
    n, d = normed.shape
    h = f.shape[1]
    grid = (n // rows,)
    return pl.pallas_call(
        _epilogue_kernel,
        out_shape=jax.ShapeDtypeStruct((num_groups, d), jnp.float32),
        grid=grid,
        in_specs=[pl.BlockSpec((1, rows), lambda i: (0, i)),
                  pl.BlockSpec((rows, d), lambda i: (i, 0)),
                  pl.BlockSpec((rows, h), lambda i: (i, 0)),
                  pl.BlockSpec((rows, h), lambda i: (i, 0))],
        out_specs=pl.BlockSpec((num_groups, d), lambda i: (0, 0)),
        scratch_shapes=[pltpu.VMEM((num_groups, h), jnp.float32),
                        pltpu.VMEM((num_groups, h), jnp.float32),
                        pltpu.VMEM((num_groups, 1), jnp.float32)],
        compiler_params=pltpu.CompilerParams(
            dimension_semantics=("arbitrary",), vmem_limit_bytes=_VMEM_LIMIT),
    )(ids_row, normed, f, r)


# ----------------------------- module wrapper -----------------------------------

def init_params(key, D, H, num_layers=2):
    params = {
        "ln_gamma": jnp.ones((1, D), jnp.float32),
        "ln_beta": jnp.zeros((1, D), jnp.float32),
        "gru": [],
    }
    bound = 1.0 / np.sqrt(H)
    for layer in range(num_layers):
        din = D if layer == 0 else 2 * H
        lp = {}
        for direction in ("fwd", "rev"):
            key, k1, k2, k3, k4 = jax.random.split(key, 5)
            wih = jax.random.uniform(k1, (3 * H, din), jnp.float32, -bound, bound)
            whh = jax.random.uniform(k2, (3 * H, H), jnp.float32, -bound, bound)
            bih = jax.random.uniform(k3, (1, 3 * H), jnp.float32, -bound, bound)
            bhh = jax.random.uniform(k4, (1, 3 * H), jnp.float32, -bound, bound)
            lp[direction] = (wih.T, whh.T, bih, bhh)  # pre-transposed for kernels
        params["gru"].append(lp)
    return params


def prepare_kernel_params(params, H):
    """Kernel-friendly parameter layout: b_hh(r,z) folded into the projection
    bias (only b_hh(n) stays in the recurrence); layer-1 W_ih split into
    fwd-half / rev-half factors (concat-free); MXU operands cast to bf16."""
    prepared = []
    for layer, lp in enumerate(params["gru"]):
        entry = {}
        for dname in ("fwd", "rev"):
            wih_t, whh_t, bih, bhh = lp[dname]
            b_proj = bih + jnp.concatenate(
                [bhh[:, :2 * H], jnp.zeros((1, H), jnp.float32)], axis=1)
            e = {"whh": whh_t.astype(jnp.bfloat16),
                 "b_proj": b_proj,
                 "bn": bhh[:, 2 * H:]}
            if layer == 0:
                e["wih"] = wih_t.astype(jnp.bfloat16)           # [D, 3H]
            else:
                e["wih_top"] = wih_t[:H].astype(jnp.bfloat16)   # fwd-half factor
                e["wih_bot"] = wih_t[H:].astype(jnp.bfloat16)   # rev-half factor
            entry[dname] = e
        prepared.append(entry)
    return prepared


def rnn_layer_forward(packed_data, group_ids, params, T, B, G):
    """packed_data: [T*B, D] time-major packed rows (equal-length sequences);
    group_ids: [T*B] int32 group id per row (-1 on non-name rows)."""
    N, D = packed_data.shape
    H = D // 2
    assert D == 2 * H, "model_dim must be even (GRU hidden = model_dim // 2)"
    assert N == T * B, "packed data assumes constant batch_sizes (equal-length sequences)"
    kp = prepare_kernel_params(params, H)

    # Tile sizes from the per-chip VMEM budget (streamed bytes per unit, fixed bytes).
    rows_ln = _pick_chunk(N, 8 * D + 12 * H, 12 * D * H + 64 * H, _VMEM_LIMIT, align=16)
    tc = _pick_chunk(T, 16 * B * H, 48 * H * H + 16 * B * H, _VMEM_LIMIT, align=1)
    rows_ep = _pick_chunk(N, 4 + 4 * D + 8 * H, 8 * G * (D + 1), _VMEM_LIMIT, align=128)

    # LayerNorm fused with the layer-0 input projection (both directions).
    normed, gi0f, gi0r = ln_project(
        packed_data, params["ln_gamma"], params["ln_beta"],
        kp[0]["fwd"]["wih"], kp[0]["rev"]["wih"],
        kp[0]["fwd"]["b_proj"], kp[0]["rev"]["b_proj"], rows_ln)

    # Layer-0 bidirectional recurrence (consumes the precomputed bf16 gi).
    f0, r0 = bigru_layer0(gi0f.reshape(T, B, 3 * H), gi0r.reshape(T, B, 3 * H),
                          kp[0]["fwd"]["whh"], kp[0]["rev"]["whh"],
                          kp[0]["fwd"]["bn"], kp[0]["rev"]["bn"], tc)

    # Layer-1 recurrence with its input projection fused in (no gi1 HBM round-trip).
    f1, r1 = bigru_layer1_fused(
        f0, r0,
        kp[1]["fwd"]["wih_top"], kp[1]["fwd"]["wih_bot"],
        kp[1]["rev"]["wih_top"], kp[1]["rev"]["wih_bot"],
        kp[1]["fwd"]["b_proj"], kp[1]["rev"]["b_proj"],
        kp[1]["fwd"]["whh"], kp[1]["rev"]["whh"],
        kp[1]["fwd"]["bn"], kp[1]["rev"]["bn"], tc)

    # Fused residual + scatter_mean epilogue (one-hot and counts built in-kernel).
    ids_row = group_ids.astype(jnp.int32).reshape(1, N)
    return epilogue_scatter_mean(ids_row, normed,
                                 f1.reshape(N, H), r1.reshape(N, H), G, rows_ep)


# ----------------------------- pure-JAX reference --------------------------------

def _gru_cell_ref(x, h, wih_t, whh_t, bih, bhh):
    gi = x @ wih_t + bih
    gh = h @ whh_t + bhh
    H = h.shape[-1]
    r = jax.nn.sigmoid(gi[:, :H] + gh[:, :H])
    z = jax.nn.sigmoid(gi[:, H:2 * H] + gh[:, H:2 * H])
    n = jnp.tanh(gi[:, 2 * H:] + r * gh[:, 2 * H:])
    return (1.0 - z) * n + z * h


def _gru_dir_ref(x, wih_t, whh_t, bih, bhh, reverse):
    B = x.shape[1]
    H = whh_t.shape[0]
    xs = x[::-1] if reverse else x

    def step(h, xt):
        h2 = _gru_cell_ref(xt, h, wih_t, whh_t, bih, bhh)
        return h2, h2

    _, ys = jax.lax.scan(step, jnp.zeros((B, H), jnp.float32), xs)
    return ys[::-1] if reverse else ys


def reference_forward(packed_data, is_name, name_ids, params, T, B, G):
    N, D = packed_data.shape
    mean = packed_data.mean(-1, keepdims=True)
    var = jnp.square(packed_data - mean).mean(-1, keepdims=True)
    normed = ((packed_data - mean) * jax.lax.rsqrt(var + 1e-5)
              * params["ln_gamma"][0] + params["ln_beta"][0])
    layer_in = normed.reshape(T, B, D)
    for lp in params["gru"]:
        f = _gru_dir_ref(layer_in, *lp["fwd"], reverse=False)
        r = _gru_dir_ref(layer_in, *lp["rev"], reverse=True)
        layer_in = jnp.concatenate([f, r], axis=-1)
    resid = normed + layer_in.reshape(N, D)
    name_rows = resid[is_name]
    sums = jax.ops.segment_sum(name_rows, name_ids, num_segments=G)
    counts = jax.ops.segment_sum(jnp.ones((name_rows.shape[0],), jnp.float32),
                                 name_ids, num_segments=G)
    return sums / jnp.maximum(counts, 1.0)[:, None]


# ----------------------------------- main -----------------------------------------

if __name__ == "__main__":
    T, B, D, H, G = 8, 4, 32, 16, 5       # seq, batch, model_dim, model_dim//2, #names
    N = T * B

    key = jax.random.PRNGKey(0)
    key, kd, kid = jax.random.split(key, 3)
    packed_data = jax.random.normal(kd, (N, D), jnp.float32)

    # deterministic name mask / ids
    is_name_np = (np.arange(N) % 3 == 0)
    num_name = int(is_name_np.sum())
    name_ids_np = np.asarray(jax.random.randint(kid, (num_name,), 0, G), dtype=np.int32)

    # full-length group ids (-1 on non-name rows)
    ids_full = np.full((N,), -1, dtype=np.int32)
    ids_full[is_name_np] = name_ids_np
    group_ids = jnp.asarray(ids_full)

    params = init_params(key, D, H)

    name_state = jax.block_until_ready(
        rnn_layer_forward(packed_data, group_ids, params, T, B, G))

    ref = reference_forward(packed_data, jnp.asarray(is_name_np),
                            jnp.asarray(name_ids_np), params, T, B, G)
    # Tolerance reflects bf16 MXU operands (f32 reference, f32 accumulation in-kernel).
    np.testing.assert_allclose(np.asarray(name_state), np.asarray(ref),
                               rtol=3e-2, atol=3e-2)
    assert name_state.shape == (G, D)
    assert bool(jnp.all(jnp.isfinite(name_state)))
    print("KERNEL_OK")
</pallas_src>

<mosaic_0001>
module attributes {stable_mosaic.version = 11 : i64} {
  func.func @_ln_proj_kernel(%arg0: i32, %arg1: memref<32x32xf32, #tpu.memory_space<vmem>>, %arg2: memref<1x32xf32, #tpu.memory_space<vmem>>, %arg3: memref<1x32xf32, #tpu.memory_space<vmem>>, %arg4: memref<32x48xbf16, #tpu.memory_space<vmem>>, %arg5: memref<32x48xbf16, #tpu.memory_space<vmem>>, %arg6: memref<1x48xf32, #tpu.memory_space<vmem>>, %arg7: memref<1x48xf32, #tpu.memory_space<vmem>>, %arg8: memref<32x32xf32, #tpu.memory_space<vmem>>, %arg9: memref<32x48xbf16, #tpu.memory_space<vmem>>, %arg10: memref<32x48xbf16, #tpu.memory_space<vmem>>) attributes {dimension_semantics = [#tpu.dimension_semantics<parallel>], iteration_bounds = array<i64: 1>, scalar_prefetch = 0 : i64, scratch_operands = 0 : i64, tpu.core_type = #tpu.core_type<tc>, window_params = [{transform_indices = @transform_0, window_bounds = array<i64: 32, 32>}, {pipeline_mode = #tpu.pipeline_mode<synchronous>, transform_indices = @transform_1, window_bounds = array<i64: 1, 32>}, {pipeline_mode = #tpu.pipeline_mode<synchronous>, transform_indices = @transform_2, window_bounds = array<i64: 1, 32>}, {pipeline_mode = #tpu.pipeline_mode<synchronous>, transform_indices = @transform_3, window_bounds = array<i64: 32, 48>}, {pipeline_mode = #tpu.pipeline_mode<synchronous>, transform_indices = @transform_4, window_bounds = array<i64: 32, 48>}, {pipeline_mode = #tpu.pipeline_mode<synchronous>, transform_indices = @transform_5, window_bounds = array<i64: 1, 48>}, {pipeline_mode = #tpu.pipeline_mode<synchronous>, transform_indices = @transform_6, window_bounds = array<i64: 1, 48>}, {transform_indices = @transform_7, window_bounds = array<i64: 32, 32>}, {transform_indices = @transform_8, window_bounds = array<i64: 32, 48>}, {transform_indices = @transform_9, window_bounds = array<i64: 32, 48>}]} {
    %c0 = arith.constant 0 : index
    %c0_0 = arith.constant 0 : index
    %0 = vector.load %arg1[%c0, %c0_0] : memref<32x32xf32, #tpu.memory_space<vmem>>, vector<32x32xf32>
    %cst = arith.constant dense<0.000000e+00> : vector<32xf32>
    %1 = vector.multi_reduction <add>, %0, %cst [1] : vector<32x32xf32> to vector<32xf32>
    %2 = vector.shape_cast %1 : vector<32xf32> to vector<32x1xf32>
    %cst_1 = arith.constant 3.200000e+01 : f32
    %3 = vector.broadcast %cst_1 : f32 to vector<32x1xf32>
    %4 = arith.divf %2, %3 : vector<32x1xf32>
    %5 = vector.broadcast %4 : vector<32x1xf32> to vector<32x32xf32>
    %6 = arith.subf %0, %5 : vector<32x32xf32>
    %7 = arith.mulf %6, %6 : vector<32x32xf32>
    %cst_2 = arith.constant dense<0.000000e+00> : vector<32xf32>
    %8 = vector.multi_reduction <add>, %7, %cst_2 [1] : vector<32x32xf32> to vector<32xf32>
    %9 = vector.shape_cast %8 : vector<32xf32> to vector<32x1xf32>
    %cst_3 = arith.constant 3.200000e+01 : f32
    %10 = vector.broadcast %cst_3 : f32 to vector<32x1xf32>
    %11 = arith.divf %9, %10 : vector<32x1xf32>
    %12 = vector.broadcast %4 : vector<32x1xf32> to vector<32x32xf32>
    %13 = arith.subf %0, %12 : vector<32x32xf32>
    %cst_4 = arith.constant 9.99999974E-6 : f32
    %14 = vector.broadcast %cst_4 : f32 to vector<32x1xf32>
    %15 = arith.addf %11, %14 : vector<32x1xf32>
    %16 = math.rsqrt %15 : vector<32x1xf32>
    %17 = vector.broadcast %16 : vector<32x1xf32> to vector<32x32xf32>
    %18 = arith.mulf %13, %17 : vector<32x32xf32>
    %c0_5 = arith.constant 0 : index
    %c0_6 = arith.constant 0 : index
    %19 = vector.load %arg2[%c0_5, %c0_6] : memref<1x32xf32, #tpu.memory_space<vmem>>, vector<1x32xf32>
    %20 = vector.broadcast %19 : vector<1x32xf32> to vector<32x32xf32>
    %21 = arith.mulf %18, %20 : vector<32x32xf32>
    %c0_7 = arith.constant 0 : index
    %c0_8 = arith.constant 0 : index
    %22 = vector.load %arg3[%c0_7, %c0_8] : memref<1x32xf32, #tpu.memory_space<vmem>>, vector<1x32xf32>
    %23 = vector.broadcast %22 : vector<1x32xf32> to vector<32x32xf32>
    %24 = arith.addf %21, %23 : vector<32x32xf32>
    %c0_9 = arith.constant 0 : index
    %c0_10 = arith.constant 0 : index
    %25 = vector.load %arg8[%c0_9, %c0_10] : memref<32x32xf32, #tpu.memory_space<vmem>>, vector<32x32xf32>
    tpu.vector_store %arg8[%c0_9, %c0_10], %24 {strides = array<i32>} : memref<32x32xf32, #tpu.memory_space<vmem>>, vector<32x32xf32>,
    %26 = arith.truncf %24 : vector<32x32xf32> to vector<32x32xbf16>
    %c0_11 = arith.constant 0 : index
    %c0_12 = arith.constant 0 : index
    %27 = vector.load %arg4[%c0_11, %c0_12] : memref<32x48xbf16, #tpu.memory_space<vmem>>, vector<32x48xbf16>
    %cst_13 = arith.constant dense<0.000000e+00> : vector<32x48xf32>
    %28 = tpu.matmul %26, %27, %cst_13 {dimension_numbers = #tpu.dot_dimension_numbers<[1], [0], [0], [1], [0, 0, 1, 1], [], []>} : vector<32x32xbf16>, vector<32x48xbf16>, vector<32x48xf32> -> vector<32x48xf32>
    %c0_14 = arith.constant 0 : index
    %c0_15 = arith.constant 0 : index
    %29 = vector.load %arg6[%c0_14, %c0_15] : memref<1x48xf32, #tpu.memory_space<vmem>>, vector<1x48xf32>
    %30 = vector.broadcast %29 : vector<1x48xf32> to vector<32x48xf32>
    %31 = arith.addf %28, %30 : vector<32x48xf32>
    %32 = arith.truncf %31 : vector<32x48xf32> to vector<32x48xbf16>
    %c0_16 = arith.constant 0 : index
    %c0_17 = arith.constant 0 : index
    %33 = vector.load %arg9[%c0_16, %c0_17] : memref<32x48xbf16, #tpu.memory_space<vmem>>, vector<32x48xbf16>
    tpu.vector_store %arg9[%c0_16, %c0_17], %32 {strides = array<i32>} : memref<32x48xbf16, #tpu.memory_space<vmem>>, vector<32x48xbf16>,
    %c0_18 = arith.constant 0 : index
    %c0_19 = arith.constant 0 : index
    %34 = vector.load %arg5[%c0_18, %c0_19] : memref<32x48xbf16, #tpu.memory_space<vmem>>, vector<32x48xbf16>
    %cst_20 = arith.constant dense<0.000000e+00> : vector<32x48xf32>
    %35 = tpu.matmul %26, %34, %cst_20 {dimension_numbers = #tpu.dot_dimension_numbers<[1], [0], [0], [1], [0, 0, 1, 1], [], []>} : vector<32x32xbf16>, vector<32x48xbf16>, vector<32x48xf32> -> vector<32x48xf32>
    %c0_21 = arith.constant 0 : index
    %c0_22 = arith.constant 0 : index
    %36 = vector.load %arg7[%c0_21, %c0_22] : memref<1x48xf32, #tpu.memory_space<vmem>>, vector<1x48xf32>
    %37 = vector.broadcast %36 : vector<1x48xf32> to vector<32x48xf32>
    %38 = arith.addf %35, %37 : vector<32x48xf32>
    %39 = arith.truncf %38 : vector<32x48xf32> to vector<32x48xbf16>
    %c0_23 = arith.constant 0 : index
    %c0_24 = arith.constant 0 : index
    %40 = vector.load %arg10[%c0_23, %c0_24] : memref<32x48xbf16, #tpu.memory_space<vmem>>, vector<32x48xbf16>
    tpu.vector_store %arg10[%c0_23, %c0_24], %39 {strides = array<i32>} : memref<32x48xbf16, #tpu.memory_space<vmem>>, vector<32x48xbf16>,
    return
  }
  func.func @transform_0(%arg0: i32) -> (i32, i32) {
    %c0_i32 = arith.constant 0 : i32
    %c0_i32_0 = arith.constant 0 : i32
    return %arg0, %c0_i32 : i32, i32
  }
  func.func @transform_1(%arg0: i32) -> (i32, i32) {
    %c0_i32 = arith.constant 0 : i32
    %c0_i32_0 = arith.constant 0 : i32
    %c0_i32_1 = arith.constant 0 : i32
    return %c0_i32, %c0_i32_0 : i32, i32
  }
  func.func @transform_2(%arg0: i32) -> (i32, i32) {
    %c0_i32 = arith.constant 0 : i32
    %c0_i32_0 = arith.constant 0 : i32
    %c0_i32_1 = arith.constant 0 : i32
    return %c0_i32, %c0_i32_0 : i32, i32
  }
  func.func @transform_3(%arg0: i32) -> (i32, i32) {
    %c0_i32 = arith.constant 0 : i32
    %c0_i32_0 = arith.constant 0 : i32
    %c0_i32_1 = arith.constant 0 : i32
    return %c0_i32, %c0_i32_0 : i32, i32
  }
  func.func @transform_4(%arg0: i32) -> (i32, i32) {
    %c0_i32 = arith.constant 0 : i32
    %c0_i32_0 = arith.constant 0 : i32
    %c0_i32_1 = arith.constant 0 : i32
    return %c0_i32, %c0_i32_0 : i32, i32
  }
  func.func @transform_5(%arg0: i32) -> (i32, i32) {
    %c0_i32 = arith.constant 0 : i32
    %c0_i32_0 = arith.constant 0 : i32
    %c0_i32_1 = arith.constant 0 : i32
    return %c0_i32, %c0_i32_0 : i32, i32
  }
  func.func @transform_6(%arg0: i32) -> (i32, i32) {
    %c0_i32 = arith.constant 0 : i32
    %c0_i32_0 = arith.constant 0 : i32
    %c0_i32_1 = arith.constant 0 : i32
    return %c0_i32, %c0_i32_0 : i32, i32
  }
  func.func @transform_7(%arg0: i32) -> (i32, i32) {
    %c0_i32 = arith.constant 0 : i32
    %c0_i32_0 = arith.constant 0 : i32
    return %arg0, %c0_i32 : i32, i32
  }
  func.func @transform_8(%arg0: i32) -> (i32, i32) {
    %c0_i32 = arith.constant 0 : i32
    %c0_i32_0 = arith.constant 0 : i32
    return %arg0, %c0_i32 : i32, i32
  }
  func.func @transform_9(%arg0: i32) -> (i32, i32) {
    %c0_i32 = arith.constant 0 : i32
    %c0_i32_0 = arith.constant 0 : i32
    return %arg0, %c0_i32 : i32, i32
  }
}

</mosaic_0001>

<llo_original>
// kernel: tpu_custom_call.1
$region0: #{tpu_custom_call.1}
  #allocation0 [shape = 'u32[]', space=smem, size = 0x4, offset = 0x4, fixed_abs, tag = 'smem constant byte address 0x4 - core index']
  #allocation1 [shape = 'u32[144,128]{1,0:T(1,128)}', space=vmem, size = 0x12000, scoped, tag = 'internal scratch']
  %s0 = inlined_call_operand.hbm [shape: f32[32,32], index: 0, kind: input, shape index: {}]
  %s1 = inlined_call_operand.vmem [shape: f32[1,32], index: 1, kind: input, shape index: {}]
  %s2 = inlined_call_operand.vmem [shape: f32[1,32], index: 2, kind: input, shape index: {}]
  %s3 = inlined_call_operand.hbm [shape: bf16[32,48], index: 3, kind: input, shape index: {}]
  %s4 = inlined_call_operand.hbm [shape: bf16[32,48], index: 4, kind: input, shape index: {}]
  %s5 = inlined_call_operand.vmem [shape: f32[1,48], index: 5, kind: input, shape index: {}]
  %s6 = inlined_call_operand.vmem [shape: f32[1,48], index: 6, kind: input, shape index: {}]
  %s7 = inlined_call_operand.hbm [shape: f32[32,32], index: 7, kind: output, shape index: {0}]
  %s8 = inlined_call_operand.hbm [shape: bf16[32,48], index: 8, kind: output, shape index: {1}]
  %s9 = inlined_call_operand.hbm [shape: bf16[32,48], index: 9, kind: output, shape index: {2}]
  %10 = xla_tuple %s7, %s8, %s9
  %s11 = sld [smem:[#allocation0]]
  $region66: #{tpu_custom_call.1} parent=0
    _
  %s13 = ssub.s32 1, %s11
  %s14 = scalar_select 0, %s13, %s11
  $region1: #{tpu_custom_call.1} parent=0
    #allocation2 [shape = 'u8[16384]{0}', space=vmem, size = 0x4000, scoped, tag = 'input window, operand 0, single buffered']
    #allocation3 [shape = 's32[1]{0}', space=sflag, size = 0x4, scoped, tag = 'scoped memory for tpu_custom_call.1']
    #allocation4 [shape = 's32[1]{0}', space=sflag, size = 0x4, scoped, tag = 'scoped memory for tpu_custom_call.1']
    #allocation5 [shape = 'u8[8192]{0}', space=vmem, size = 0x2000, scoped, tag = 'input window, operand 3, single buffered']
    #allocation6 [shape = 's32[1]{0}', space=sflag, size = 0x4, scoped, tag = 'scoped memory for tpu_custom_call.1']
    #allocation7 [shape = 'u8[8192]{0}', space=vmem, size = 0x2000, scoped, tag = 'input window, operand 4, single buffered']
    #allocation8 [shape = 'u8[16384]{0}', space=vmem, size = 0x4000, scoped, tag = 'output window, operand 0, single buffered']
    #allocation9 [shape = 'u8[8192]{0}', space=vmem, size = 0x2000, scoped, tag = 'output window, operand 1, single buffered']
    #allocation10 [shape = 's32[1]{0}', space=sflag, size = 0x4, scoped, tag = 'scoped memory for tpu_custom_call.1']
    #allocation11 [shape = 'u8[8192]{0}', space=vmem, size = 0x2000, scoped, tag = 'output window, operand 2, single buffered']
    %15 = vsyncpa [#allocation3], 0
    %16 = vsyncpa [#allocation6], 0
    %17 = vsyncpa [#allocation4], 0
    %18 = vsyncpa [#allocation10], 0
    // Predicated region
    $region2: #{tpu_custom_call.1} parent=1 // pred_check
      _
    $region3: #{tpu_custom_call.1} parent=1 // pred_check_branch
      %20 = sbr.rel (0) target = $region5
    $region4: #{tpu_custom_call.1} parent=1 // pred_region
      %s22 = ssub.s32 512, 512
      %23 = vsyncadd [#allocation3], %s22
      %s24 = sshll.u32 [#allocation2], 4
      %s25 = int_to_ptr.vmem [resolvable:$true] %s24
      %30 = dma.hbm_to_vmem [thread:$0]  %s0, 512, %s25, [#allocation3], 128, 128, 8
    $region5: #{tpu_custom_call.1} parent=1 // pred_fallthru
      _
    // Predicated region
    $region6: #{tpu_custom_call.1} parent=1 // pred_check
      _
    $region7: #{tpu_custom_call.1} parent=1 // pred_check_branch
      %32 = sbr.rel (0) target = $region9
    $region8: #{tpu_custom_call.1} parent=1 // pred_region
      _
    $region9: #{tpu_custom_call.1} parent=1 // pred_fallthru
      _
    // Predicated region
    $region10: #{tpu_custom_call.1} parent=1 // pred_check
      _
    $region11: #{tpu_custom_call.1} parent=1 // pred_check_branch
      %34 = sbr.rel (0) target = $region13
    $region12: #{tpu_custom_call.1} parent=1 // pred_region
      _
    $region13: #{tpu_custom_call.1} parent=1 // pred_fallthru
      _
    // Predicated region
    $region14: #{tpu_custom_call.1} parent=1 // pred_check
      _
    $region15: #{tpu_custom_call.1} parent=1 // pred_check_branch
      %36 = sbr.rel (0) target = $region17
    $region16: #{tpu_custom_call.1} parent=1 // pred_region
      %s38 = ssub.s32 256, 256
      %39 = vsyncadd [#allocation6], %s38
      %s40 = sshll.u32 [#allocation5], 4
      %s41 = int_to_ptr.vmem [resolvable:$true] %s40
      %46 = dma.hbm_to_vmem [thread:$0]  %s3, 256, %s41, [#allocation6], 64, 64, 4
    $region17: #{tpu_custom_call.1} parent=1 // pred_fallthru
      _
    // Predicated region
    $region18: #{tpu_custom_call.1} parent=1 // pred_check
      _
    $region19: #{tpu_custom_call.1} parent=1 // pred_check_branch
      %48 = sbr.rel (0) target = $region21
    $region20: #{tpu_custom_call.1} parent=1 // pred_region
      %s50 = ssub.s32 256, 256
      %51 = vsyncadd [#allocation6], %s50
      %s52 = sshll.u32 [#allocation7], 4
      %s53 = int_to_ptr.vmem [resolvable:$true] %s52
      %58 = dma.hbm_to_vmem [thread:$0]  %s4, 256, %s53, [#allocation6], 64, 64, 4
    $region21: #{tpu_custom_call.1} parent=1 // pred_fallthru
      _
    // Predicated region
    $region22: #{tpu_custom_call.1} parent=1 // pred_check
      _
    $region23: #{tpu_custom_call.1} parent=1 // pred_check_branch
      %60 = sbr.rel (0) target = $region25
    $region24: #{tpu_custom_call.1} parent=1 // pred_region
      _
    $region25: #{tpu_custom_call.1} parent=1 // pred_fallthru
      _
    // Predicated region
    $region26: #{tpu_custom_call.1} parent=1 // pred_check
      _
    $region27: #{tpu_custom_call.1} parent=1 // pred_check_branch
      %62 = sbr.rel (0) target = $region29
    $region28: #{tpu_custom_call.1} parent=1 // pred_region
      _
    $region29: #{tpu_custom_call.1} parent=1 // pred_fallthru
      _
    // Predicated region
    $region30: #{tpu_custom_call.1} parent=1 // pred_check
      _
    $region31: #{tpu_custom_call.1} parent=1 // pred_check_branch
      %64 = sbr.rel (0) target = $region33
    $region32: #{tpu_custom_call.1} parent=1 // pred_region
      %65 = dma.done [#allocation3], 512
    $region33: #{tpu_custom_call.1} parent=1 // pred_fallthru
      _
    // Predicated region
    $region34: #{tpu_custom_call.1} parent=1 // pred_check
      _
    $region35: #{tpu_custom_call.1} parent=1 // pred_check_branch
      %67 = sbr.rel (0) target = $region37
    $region36: #{tpu_custom_call.1} parent=1 // pred_region
      %68 = dma.done [#allocation6], 256
    $region37: #{tpu_custom_call.1} parent=1 // pred_fallthru
      _
    // Predicated region
    $region38: #{tpu_custom_call.1} parent=1 // pred_check
      _
    $region39: #{tpu_custom_call.1} parent=1 // pred_check_branch
      %70 = sbr.rel (0) target = $region41
    $region40: #{tpu_custom_call.1} parent=1 // pred_region
      %71 = dma.done [#allocation6], 256
    $region41: #{tpu_custom_call.1} parent=1 // pred_fallthru
      _
    %v73 = vld [vmem:[#allocation2] sm:$0xff]
    %v74 = vld [vmem:[#allocation2 + $0x8] sm:$0xff]
    %v75 = vld [vmem:[#allocation2 + $0x10] sm:$0xff]
    %v76 = vld [vmem:[#allocation2 + $0x18] sm:$0xff]
    %vm77 = vcmask 261120
    %v78 = vsel %vm77, %v73, 0.0
    %79 = vadd.xlane.f32.xlu0 %v78
    %v80 = vpop.xlane.xlu0 %79
    %v81 = vsel %vm77, %v74, 0.0
    %82 = vadd.xlane.f32.xlu0 %v81
    %v83 = vpop.xlane.xlu0 %82
    %v84 = vsel %vm77, %v75, 0.0
    %85 = vadd.xlane.f32.xlu0 %v84
    %v86 = vpop.xlane.xlu0 %85
    %v87 = vsel %vm77, %v76, 0.0
    %88 = vadd.xlane.f32.xlu0 %v87
    %v89 = vpop.xlane.xlu0 %88
    %v90 = vrcp.pop 32.0
    %v91 = vmul.f32 %v80, %v90
    %v92 = vmul.f32 %v83, %v90
    %v93 = vmul.f32 %v86, %v90
    %v94 = vmul.f32 %v89, %v90
    %v95 = vsub.f32 %v73, %v91
    %v96 = vsub.f32 %v74, %v92
    %v97 = vsub.f32 %v75, %v93
    %v98 = vsub.f32 %v76, %v94
    %v99 = vmul.f32 %v95, %v95
    %v100 = vmul.f32 %v96, %v96
    %v101 = vmul.f32 %v97, %v97
    %v102 = vmul.f32 %v98, %v98
    %v103 = vsel %vm77, %v99, 0.0
    %104 = vadd.xlane.f32.xlu0 %v103
    %v105 = vpop.xlane.xlu0 %104
    %v106 = vsel %vm77, %v100, 0.0
    %107 = vadd.xlane.f32.xlu0 %v106
    %v108 = vpop.xlane.xlu0 %107
    %v109 = vsel %vm77, %v101, 0.0
    %110 = vadd.xlane.f32.xlu0 %v109
    %v111 = vpop.xlane.xlu0 %110
    %v112 = vsel %vm77, %v102, 0.0
    %113 = vadd.xlane.f32.xlu0 %v112
    %v114 = vpop.xlane.xlu0 %113
    %v115 = vmul.f32 %v105, %v90
    %v116 = vmul.f32 %v108, %v90
    %v117 = vmul.f32 %v111, %v90
    %v118 = vmul.f32 %v114, %v90
    %v119 = vadd.f32 %v115, 1e-05
    %v120 = vadd.f32 %v116, 1e-05
    %v121 = vadd.f32 %v117, 1e-05
    %v122 = vadd.f32 %v118, 1e-05
    %v123 = vrsqrt.pop %v119
    %v124 = vrsqrt.pop %v120
    %v125 = vrsqrt.pop %v121
    %v126 = vrsqrt.pop %v122
    %v127 = vmul.f32 %v95, %v123
    %v128 = vmul.f32 %v96, %v124
    %v129 = vmul.f32 %v97, %v125
    %v130 = vmul.f32 %v98, %v126
    %v131 = vld [vmem:[%s1] sm:$0x1]
    %v133 = vlaneseq
    %v134 = vshrl.u32 %v133, 7
    %v135 = vsub.s32 0, %v134
    %v136 = vrot.slane %v131, %v135
    %v138 = vmul.f32 %v127, %v136
    %v139 = vmul.f32 %v128, %v136
    %v140 = vmul.f32 %v129, %v136
    %v141 = vmul.f32 %v130, %v136
    %v142 = vld [vmem:[%s2] sm:$0x1]
    %v144 = vlaneseq
    %v145 = vshrl.u32 %v144, 7
    %v146 = vsub.s32 0, %v145
    %v147 = vrot.slane %v142, %v146
    %v149 = vadd.f32 %v138, %v147
    %v150 = vadd.f32 %v139, %v147
    %v151 = vadd.f32 %v140, %v147
    %v152 = vadd.f32 %v141, %v147
    %153 = vst.msk [vmem:[#allocation8] sm:$0xff] %vm77, %v149
    %154 = vst.msk [vmem:[#allocation8 + $0x8] sm:$0xff] %vm77, %v150
    %155 = vst.msk [vmem:[#allocation8 + $0x10] sm:$0xff] %vm77, %v151
    %156 = vst.msk [vmem:[#allocation8 + $0x18] sm:$0xff] %vm77, %v152
    %v157 = vpack.c.bf16 %v150, %v149
    %v158 = vpack.c.bf16 %v152, %v151
    %v159 = vld [vmem:[#allocation5] sm:$0xf]
    %v160 = vld [vmem:[#allocation5 + $0x4] sm:$0xf]
    %v161 = vld [vmem:[#allocation5 + $0x8] sm:$0xf]
    %v162 = vld [vmem:[#allocation5 + $0xc] sm:$0xf]
    %v163 = vld [vmem:[%s5] sm:$0x1]
    %v165 = vlaneseq
    %v166 = vshrl.u32 %v165, 7
    %v167 = vsub.s32 0, %v166
    %v168 = vrot.slane %v163, %v167
    %v174 = vunpack.c.l.b16 %v159
    %v175 = vunpack.c.l.b16 %v160
    %v176 = vunpack.c.l.b16 %v161
    %v177 = vunpack.c.l.b16 %v162
    %v178 = vpack.c.b16 %v175, %v174
    %v179 = vpack.c.b16 %v177, %v176
    %v183 = vsel %vm77, %v157, 0
    %v186 = vsel %vm77, %v158, 0
    %188 = vmatprep.subr.bf16.mxu0 0
    %189 = vmatpush1.bf16.msra.mxu0 0
    %190 = vmatprep.subr.bf16.mxu0 0
    %191 = vmatpush1.bf16.msra.mxu0 0
    %192 = vmatprep.subr.bf16.mxu0 0
    %193 = vmatpush1.bf16.msra.mxu0 0
    %194 = vmatprep.subr.bf16.mxu0 0
    %195 = vmatpush1.bf16.msra.mxu0 0
    %196 = vmatprep.subr.bf16.mxu0 0
    %197 = vmatpush1.bf16.msra.mxu0 0
    %198 = vmatprep.subr.bf16.mxu0 0
    %199 = vmatpush1.bf16.msra.mxu0 0
    %200 = vmatprep.subr.bf16.mxu0 0
    %201 = vmatpush1.bf16.msra.mxu0 %v179
    %202 = vmatprep.subr.bf16.mxu0 0
    %203 = vmatpush1.bf16.msra.mxu0 %v178
    %204 = vmatprep.subr.bf16.mxu0 0
    %205 = vmatpush2.bf16.msra.mxu0 0
    %206 = vmatprep.subr.bf16.mxu0 0
    %207 = vmatpush2.bf16.msra.mxu0 0
    %208 = vmatprep.subr.bf16.mxu0 0
    %209 = vmatpush2.bf16.msra.mxu0 0
    %210 = vmatprep.subr.bf16.mxu0 0
    %211 = vmatpush2.bf16.msra.mxu0 0
    %212 = vmatprep.subr.bf16.mxu0 0
    %213 = vmatpush2.bf16.msra.mxu0 0
    %214 = vmatprep.subr.bf16.mxu0 0
    %215 = vmatpush2.bf16.msra.mxu0 0
    %216 = vmatprep.subr.bf16.mxu0 0
    %217 = vmatpush2.bf16.msra.mxu0 0
    %218 = vmatprep.subr.bf16.mxu0 0
    %219 = vmatpush2.bf16.msra.mxu0 0
    %220 = vmatprep.mubr.bf16.mxu0 0
    %221 = vmatmul.mubr.bf16.gmra.mxu0 %v183
    %v222 = vpop.f32.mrf.mxu0
    %v223 = vadd.f32 %v168, %v222
    %v224 = vpop.f32.mrf.mxu0
    %v225 = vpop.f32.mrf.mxu0
    %v226 = vadd.f32 %v168, %v225
    %v227 = vpop.f32.mrf.mxu0
    %228 = vmatprep.mubr.bf16.mxu0 0
    %229 = vmatmul.mubr.bf16.gmra.mxu0 %v186
    %v230 = vpop.f32.mrf.mxu0
    %v231 = vadd.f32 %v168, %v230
    %v232 = vpop.f32.mrf.mxu0
    %v233 = vpop.f32.mrf.mxu0
    %v234 = vadd.f32 %v168, %v233
    %v235 = vpop.f32.mrf.mxu0
    %236 = vdwg.mxu0
    %v237 = vpack.c.bf16 %v226, %v223
    %v238 = vpack.c.bf16 %v234, %v231
    %v241 = vunpack.c.l.b16 %v237
    %v242 = vunpack.c.h.b16 %v237
    %v243 = vunpack.c.l.b16 %v238
    %v244 = vunpack.c.h.b16 %v238
    %v245 = vpack.c.b16 %v241, %v241
    %v246 = vpack.c.b16 %v242, %v242
    %v247 = vpack.c.b16 %v243, %v243
    %v248 = vpack.c.b16 %v244, %v244
    %vm253 = vcmask 388096
    %254 = vst.msk [vmem:[#allocation9] sm:$0xf] %vm253, %v245
    %255 = vst.msk [vmem:[#allocation9 + $0x4] sm:$0xf] %vm253, %v246
    %256 = vst.msk [vmem:[#allocation9 + $0x8] sm:$0xf] %vm253, %v247
    %257 = vst.msk [vmem:[#allocation9 + $0xc] sm:$0xf] %vm253, %v248
    %v258 = vld [vmem:[#allocation7] sm:$0xf]
    %v259 = vld [vmem:[#allocation7 + $0x4] sm:$0xf]
    %v260 = vld [vmem:[#allocation7 + $0x8] sm:$0xf]
    %v261 = vld [vmem:[#allocation7 + $0xc] sm:$0xf]
    %v262 = vld [vmem:[%s6] sm:$0x1]
    %v264 = vlaneseq
    %v265 = vshrl.u32 %v264, 7
    %v266 = vsub.s32 0, %v265
    %v267 = vrot.slane %v262, %v266
    %v273 = vunpack.c.l.b16 %v258
    %v274 = vunpack.c.l.b16 %v259
    %v275 = vunpack.c.l.b16 %v260
    %v276 = vunpack.c.l.b16 %v261
    %v277 = vpack.c.b16 %v274, %v273
    %v278 = vpack.c.b16 %v276, %v275
    %281 = vmatprep.subr.bf16.mxu0 0
    %282 = vmatpush1.bf16.msra.mxu0 0
    %283 = vmatprep.subr.bf16.mxu0 0
    %284 = vmatpush1.bf16.msra.mxu0 0
    %285 = vmatprep.subr.bf16.mxu0 0
    %286 = vmatpush1.bf16.msra.mxu0 0
    %287 = vmatprep.subr.bf16.mxu0 0
    %288 = vmatpush1.bf16.msra.mxu0 0
    %289 = vmatprep.subr.bf16.mxu0 0
    %290 = vmatpush1.bf16.msra.mxu0 0
    %291 = vmatprep.subr.bf16.mxu0 0
    %292 = vmatpush1.bf16.msra.mxu0 0
    %293 = vmatprep.subr.bf16.mxu0 0
    %294 = vmatpush1.bf16.msra.mxu0 %v278
    %295 = vmatprep.subr.bf16.mxu0 0
    %296 = vmatpush1.bf16.msra.mxu0 %v277
    %297 = vmatprep.subr.bf16.mxu0 0
    %298 = vmatpush2.bf16.msra.mxu0 0
    %299 = vmatprep.subr.bf16.mxu0 0
    %300 = vmatpush2.bf16.msra.mxu0 0
    %301 = vmatprep.subr.bf16.mxu0 0
    %302 = vmatpush2.bf16.msra.mxu0 0
    %303 = vmatprep.subr.bf16.mxu0 0
    %304 = vmatpush2.bf16.msra.mxu0 0
    %305 = vmatprep.subr.bf16.mxu0 0
    %306 = vmatpush2.bf16.msra.mxu0 0
    %307 = vmatprep.subr.bf16.mxu0 0
    %308 = vmatpush2.bf16.msra.mxu0 0
    %309 = vmatprep.subr.bf16.mxu0 0
    %310 = vmatpush2.bf16.msra.mxu0 0
    %311 = vmatprep.subr.bf16.mxu0 0
    %312 = vmatpush2.bf16.msra.mxu0 0
    %313 = vmatprep.mubr.bf16.mxu0 0
    %314 = vmatmul.mubr.bf16.gmra.mxu0 %v183
    %v315 = vpop.f32.mrf.mxu0
    %v316 = vadd.f32 %v267, %v315
    %v317 = vpop.f32.mrf.mxu0
    %v318 = vpop.f32.mrf.mxu0
    %v319 = vadd.f32 %v267, %v318
    %v320 = vpop.f32.mrf.mxu0
    %321 = vmatprep.mubr.bf16.mxu0 0
    %322 = vmatmul.mubr.bf16.gmra.mxu0 %v186
    %v323 = vpop.f32.mrf.mxu0
    %v324 = vadd.f32 %v267, %v323
    %v325 = vpop.f32.mrf.mxu0
    %v326 = vpop.f32.mrf.mxu0
    %v327 = vadd.f32 %v267, %v326
    %v328 = vpop.f32.mrf.mxu0
    %329 = vdwg.mxu0
    %v330 = vpack.c.bf16 %v319, %v316
    %v331 = vpack.c.bf16 %v327, %v324
    %v334 = vunpack.c.l.b16 %v330
    %v335 = vunpack.c.h.b16 %v330
    %v336 = vunpack.c.l.b16 %v331
    %v337 = vunpack.c.h.b16 %v331
    %v338 = vpack.c.b16 %v334, %v334
    %v339 = vpack.c.b16 %v335, %v335
    %v340 = vpack.c.b16 %v336, %v336
    %v341 = vpack.c.b16 %v337, %v337
    %346 = vst.msk [vmem:[#allocation11] sm:$0xf] %vm253, %v338
    %347 = vst.msk [vmem:[#allocation11 + $0x4] sm:$0xf] %vm253, %v339
    %348 = vst.msk [vmem:[#allocation11 + $0x8] sm:$0xf] %vm253, %v340
    %349 = vst.msk [vmem:[#allocation11 + $0xc] sm:$0xf] %vm253, %v341
    // Predicated region
    $region42: #{tpu_custom_call.1} parent=1 // pred_check
      _
    $region43: #{tpu_custom_call.1} parent=1 // pred_check_branch
      %351 = sbr.rel (0) target = $region45
    $region44: #{tpu_custom_call.1} parent=1 // pred_region
      %s353 = ssub.s32 512, 512
      %354 = vsyncadd [#allocation4], %s353
      %s355 = sshll.u32 [#allocation8], 4
      %s356 = int_to_ptr.vmem [resolvable:$true] %s355
      %361 = dma.vmem_to_hbm [thread:$0]  %s356, 512, %s7, [#allocation4], 128, 128, 8
    $region45: #{tpu_custom_call.1} parent=1 // pred_fallthru
      _
    // Predicated region
    $region46: #{tpu_custom_call.1} parent=1 // pred_check
      _
    $region47: #{tpu_custom_call.1} parent=1 // pred_check_branch
      %363 = sbr.rel (0) target = $region49
    $region48: #{tpu_custom_call.1} parent=1 // pred_region
      %s365 = ssub.s32 256, 256
      %366 = vsyncadd [#allocation10], %s365
      %s367 = sshll.u32 [#allocation9], 4
      %s368 = int_to_ptr.vmem [resolvable:$true] %s367
      %373 = dma.vmem_to_hbm [thread:$0]  %s368, 256, %s8, [#allocation10], 64, 64, 4
    $region49: #{tpu_custom_call.1} parent=1 // pred_fallthru
      _
    // Predicated region
    $region50: #{tpu_custom_call.1} parent=1 // pred_check
      _
    $region51: #{tpu_custom_call.1} parent=1 // pred_check_branch
      %375 = sbr.rel (0) target = $region53
    $region52: #{tpu_custom_call.1} parent=1 // pred_region
      %s377 = ssub.s32 256, 256
      %378 = vsyncadd [#allocation10], %s377
      %s379 = sshll.u32 [#allocation11], 4
      %s380 = int_to_ptr.vmem [resolvable:$true] %s379
      %385 = dma.vmem_to_hbm [thread:$0]  %s380, 256, %s9, [#allocation10], 64, 64, 4
    $region53: #{tpu_custom_call.1} parent=1 // pred_fallthru
      _
    // Predicated region
    $region54: #{tpu_custom_call.1} parent=1 // pred_check
      _
    $region55: #{tpu_custom_call.1} parent=1 // pred_check_branch
      %387 = sbr.rel (0) target = $region57
    $region56: #{tpu_custom_call.1} parent=1 // pred_region
      %388 = dma.done [#allocation4], 512
    $region57: #{tpu_custom_call.1} parent=1 // pred_fallthru
      _
    // Predicated region
    $region58: #{tpu_custom_call.1} parent=1 // pred_check
      _
    $region59: #{tpu_custom_call.1} parent=1 // pred_check_branch
      %390 = sbr.rel (0) target = $region61
    $region60: #{tpu_custom_call.1} parent=1 // pred_region
      %391 = dma.done [#allocation10], 256
    $region61: #{tpu_custom_call.1} parent=1 // pred_fallthru
      _
    // Predicated region
    $region62: #{tpu_custom_call.1} parent=1 // pred_check
      _
    $region63: #{tpu_custom_call.1} parent=1 // pred_check_branch
      %393 = sbr.rel (0) target = $region65
    $region64: #{tpu_custom_call.1} parent=1 // pred_region
      %394 = dma.done [#allocation10], 256
    $region65: #{tpu_custom_call.1} parent=1 // pred_fallthru
      _
    %395 = vsyncpa [#allocation3], 1
    %396 = vsyncpa [#allocation6], 1
    %397 = vsyncpa [#allocation4], 1
    %398 = vsyncpa [#allocation10], 1

</llo_original>
